<compile_context>
chip_gen: v6e
topology: v6e:2x2x1
jax: 0.10.0
libtpu: 0.0.40
codegen_flags: <defaults>
</compile_context>

<pallas_src>
import math
from functools import partial

import jax
import jax.numpy as jnp
from jax.experimental import pallas as pl
from jax.experimental.pallas import tpu as pltpu


def _round_up(v, m):
    return (v + m - 1) // m * m


def _silu(v):
    # silu(v) = v * sigmoid(v); sigmoid via tanh -> one EUP op, no VPU divide.
    return v * (0.5 * (jnp.tanh(0.5 * v) + 1.0))


def _gram_kernel(beta_ref, x_ref, w_ref, bias0_ref, gamma_ref, lnb_ref, o_ref,
                 *, degrees, n_valid):
    x = x_ref[...]                                    # (TB, Cin) f32

    # Gram polynomial recurrence on t = tanh(x); chunk 0 is the base branch.
    t = jnp.tanh(x)
    chunks = [_silu(x)]                               # pairs with base_weights.T rows
    if degrees >= 1:
        p0 = jnp.ones_like(t)
        p1 = t
        chunks.append(_silu(p1))
        for i in range(2, degrees + 1):
            p2 = t * p1 - beta_ref[i - 1] * p0        # beta scalar read from SMEM
            chunks.append(_silu(p2))
            p0, p1 = p1, p2
    p = chunks[0] if len(chunks) == 1 else jnp.concatenate(chunks, axis=-1)

    # Single wide-K MXU contraction + constant degree-0 bias.
    y = jnp.dot(p, w_ref[...], preferred_element_type=jnp.float32)
    y = y + bias0_ref[...]                            # (TB, Np); padded lanes == 0

    # LayerNorm over the first n_valid channels (eps=1e-5, biased variance),
    # masking the zero-padded lanes, then final SiLU.
    inv_n = 1.0 / float(n_valid)
    mean = jnp.sum(y, axis=-1, keepdims=True) * inv_n
    lane = jax.lax.broadcasted_iota(jnp.int32, y.shape, dimension=1)
    diff = jnp.where(lane < n_valid, y - mean, 0.0)
    var = jnp.sum(diff * diff, axis=-1, keepdims=True) * inv_n
    yn = diff * jax.lax.rsqrt(var + 1e-5)
    yn = yn * gamma_ref[...] + lnb_ref[...]
    o_ref[...] = _silu(yn)


def gram_layer_forward(x, base_weights, grams_basis_weights, beta_weights,
                       ln_gamma, ln_beta, *, degrees, batch_tile=256):
    B, cin = x.shape
    cout = base_weights.shape[0]
    d1 = degrees + 1

    # ---- glue: coefficient precompute & weight packing (plain JAX) ----
    # beta(n, n+1) exactly as written in the PyTorch module.
    n = jnp.arange(d1, dtype=jnp.float32)
    m = n + 1.0
    beta_coef = ((m + n) * (m - n) * n ** 2 /
                 (m ** 2 / (4.0 * n ** 2 - 1.0)) * beta_weights)
    beta_coef = beta_coef.astype(jnp.float32)                    # (D+1,) -> SMEM

    # Fused weight slab: rows = [base_weights.T ; gram_w[:,:,1] ; ... ; gram_w[:,:,D]].
    bw_t = base_weights.T.astype(jnp.float32)                    # (Cin, Cout)
    gbw = grams_basis_weights.astype(jnp.float32)                # (Cin, Cout, D+1)
    w_big = jnp.concatenate(
        [bw_t] + [gbw[:, :, d] for d in range(1, d1)], axis=0)   # (Cin*(D+1), Cout)

    # Constant degree-0 contribution: silu(ones) @ gram_w[:,:,0].
    silu1 = 1.0 / (1.0 + math.exp(-1.0))
    bias0 = silu1 * jnp.sum(gbw[:, :, 0], axis=0)                # (Cout,)

    gamma = ln_gamma.astype(jnp.float32)
    lnb = ln_beta.astype(jnp.float32)

    # Lane-dense padding of the channel axis to a multiple of 128.
    n_pad = _round_up(cout, 128)
    if n_pad != cout:
        pc = n_pad - cout
        w_big = jnp.pad(w_big, ((0, 0), (0, pc)))
        bias0 = jnp.pad(bias0, (0, pc))
        gamma = jnp.pad(gamma, (0, pc))
        lnb = jnp.pad(lnb, (0, pc))
    bias0 = bias0.reshape(1, n_pad)
    gamma = gamma.reshape(1, n_pad)
    lnb = lnb.reshape(1, n_pad)

    # Batch tiling: at most `batch_tile` rows per grid step, multiple of 8.
    tb = min(_round_up(batch_tile, 8), _round_up(B, 8))
    b_pad = _round_up(B, tb)
    x32 = x.astype(jnp.float32)
    if b_pad != B:
        x32 = jnp.pad(x32, ((0, b_pad - B), (0, 0)))

    k = cin * d1
    kernel = partial(_gram_kernel, degrees=degrees, n_valid=cout)

    out = pl.pallas_call(
        kernel,
        out_shape=jax.ShapeDtypeStruct((b_pad, n_pad), jnp.float32),
        grid_spec=pltpu.PrefetchScalarGridSpec(
            num_scalar_prefetch=1,                                # beta_coef -> SMEM
            grid=(b_pad // tb,),
            in_specs=[
                pl.BlockSpec((tb, cin), lambda i, beta: (i, 0)),   # x batch tile
                pl.BlockSpec((k, n_pad), lambda i, beta: (0, 0)),  # fused weights
                pl.BlockSpec((1, n_pad), lambda i, beta: (0, 0)),  # degree-0 bias
                pl.BlockSpec((1, n_pad), lambda i, beta: (0, 0)),  # LN gamma
                pl.BlockSpec((1, n_pad), lambda i, beta: (0, 0)),  # LN beta
            ],
            out_specs=pl.BlockSpec((tb, n_pad), lambda i, beta: (i, 0)),
        ),
        compiler_params=pltpu.CompilerParams(
            # Batch tiles are independent -> shard across v7x's 2 TensorCores.
            dimension_semantics=("parallel",)),
    )(beta_coef, x32, w_big, bias0, gamma, lnb)

    return out[:B, :cout]


def gram_layer_reference(x, base_weights, grams_basis_weights, beta_weights,
                         ln_gamma, ln_beta, *, degrees):
    """Plain-JAX reference mirroring the PyTorch forward."""
    def silu(v):
        return v * jax.nn.sigmoid(v)

    basis = silu(x) @ base_weights.T
    t = jnp.tanh(x)
    n = jnp.arange(degrees + 1, dtype=jnp.float32)
    m = n + 1.0
    beta_coef = ((m + n) * (m - n) * n ** 2 /
                 (m ** 2 / (4.0 * n ** 2 - 1.0)) * beta_weights)
    p0 = jnp.ones_like(t)
    polys = [p0]
    if degrees >= 1:
        p1 = t
        polys.append(p1)
        for i in range(2, degrees + 1):
            p2 = t * p1 - beta_coef[i - 1] * p0
            polys.append(p2)
            p0, p1 = p1, p2
    gb = silu(jnp.stack(polys, axis=-1))                    # (B, Cin, D+1)
    y = jnp.einsum('bld,lod->bo', gb, grams_basis_weights)
    y = y + basis
    mean = jnp.mean(y, axis=-1, keepdims=True)
    var = jnp.mean((y - mean) ** 2, axis=-1, keepdims=True)
    yn = (y - mean) / jnp.sqrt(var + 1e-5) * ln_gamma + ln_beta
    return silu(yn)


if __name__ == "__main__":
    B, in_ch, out_ch, degrees = 20, 16, 32, 3   # B not a tile multiple: exercises padding
    d1 = degrees + 1

    key = jax.random.PRNGKey(0)
    kb, kg, kw, kx = jax.random.split(key, 4)

    # Deterministic synthetic parameters matching __init__ shapes / init style.
    beta_weights = (jax.random.normal(kb, (d1,), dtype=jnp.float32)
                    * (1.0 / (in_ch * (degrees + 1.0))))
    bound_g = math.sqrt(6.0 / (out_ch * d1 + in_ch * d1))      # xavier_uniform-ish
    grams_basis_weights = jax.random.uniform(
        kg, (in_ch, out_ch, d1), minval=-bound_g, maxval=bound_g,
        dtype=jnp.float32)
    bound_b = math.sqrt(6.0 / (in_ch + out_ch))                # xavier_uniform
    base_weights = jax.random.uniform(
        kw, (out_ch, in_ch), minval=-bound_b, maxval=bound_b, dtype=jnp.float32)
    ln_gamma = jnp.ones((out_ch,), jnp.float32)                # LayerNorm defaults
    ln_beta = jnp.zeros((out_ch,), jnp.float32)

    x = jax.random.normal(kx, (B, in_ch), dtype=jnp.float32)

    fwd = jax.jit(partial(gram_layer_forward, degrees=degrees, batch_tile=8))
    out = jax.block_until_ready(
        fwd(x, base_weights, grams_basis_weights, beta_weights, ln_gamma, ln_beta))

    ref = gram_layer_reference(x, base_weights, grams_basis_weights,
                               beta_weights, ln_gamma, ln_beta, degrees=degrees)
    assert out.shape == (B, out_ch)
    assert jnp.allclose(out, ref, atol=1e-4, rtol=1e-4), "mismatch vs reference"

    print("KERNEL_OK")
</pallas_src>

<mosaic_0001>
module attributes {stable_mosaic.version = 11 : i64} {
  func.func @_gram_kernel(%arg0: i32, %arg1: memref<4xf32, #tpu.memory_space<smem>>, %arg2: memref<8x16xf32, #tpu.memory_space<vmem>>, %arg3: memref<64x128xf32, #tpu.memory_space<vmem>>, %arg4: memref<1x128xf32, #tpu.memory_space<vmem>>, %arg5: memref<1x128xf32, #tpu.memory_space<vmem>>, %arg6: memref<1x128xf32, #tpu.memory_space<vmem>>, %arg7: memref<8x128xf32, #tpu.memory_space<vmem>>) attributes {dimension_semantics = [#tpu.dimension_semantics<parallel>], iteration_bounds = array<i64: 3>, scalar_prefetch = 1 : i64, scratch_operands = 0 : i64, tpu.core_type = #tpu.core_type<tc>, window_params = [{transform_indices = @transform_0, window_bounds = array<i64: 8, 16>}, {pipeline_mode = #tpu.pipeline_mode<synchronous>, transform_indices = @transform_1, window_bounds = array<i64: 64, 128>}, {pipeline_mode = #tpu.pipeline_mode<synchronous>, transform_indices = @transform_2, window_bounds = array<i64: 1, 128>}, {pipeline_mode = #tpu.pipeline_mode<synchronous>, transform_indices = @transform_3, window_bounds = array<i64: 1, 128>}, {pipeline_mode = #tpu.pipeline_mode<synchronous>, transform_indices = @transform_4, window_bounds = array<i64: 1, 128>}, {transform_indices = @transform_5, window_bounds = array<i64: 8, 128>}]} {
    %c0 = arith.constant 0 : index
    %c0_0 = arith.constant 0 : index
    %0 = vector.load %arg2[%c0, %c0_0] : memref<8x16xf32, #tpu.memory_space<vmem>>, vector<8x16xf32>
    %1 = math.tanh %0 : vector<8x16xf32>
    %cst = arith.constant 5.000000e-01 : f32
    %2 = vector.broadcast %cst : f32 to vector<8x16xf32>
    %3 = arith.mulf %2, %0 : vector<8x16xf32>
    %4 = math.tanh %3 : vector<8x16xf32>
    %cst_1 = arith.constant 1.000000e+00 : f32
    %5 = vector.broadcast %cst_1 : f32 to vector<8x16xf32>
    %6 = arith.addf %4, %5 : vector<8x16xf32>
    %cst_2 = arith.constant 5.000000e-01 : f32
    %7 = vector.broadcast %cst_2 : f32 to vector<8x16xf32>
    %8 = arith.mulf %7, %6 : vector<8x16xf32>
    %9 = arith.mulf %0, %8 : vector<8x16xf32>
    %cst_3 = arith.constant 1.000000e+00 : f32
    %10 = vector.broadcast %cst_3 : f32 to vector<8x16xf32>
    %cst_4 = arith.constant 5.000000e-01 : f32
    %11 = vector.broadcast %cst_4 : f32 to vector<8x16xf32>
    %12 = arith.mulf %11, %1 : vector<8x16xf32>
    %13 = math.tanh %12 : vector<8x16xf32>
    %cst_5 = arith.constant 1.000000e+00 : f32
    %14 = vector.broadcast %cst_5 : f32 to vector<8x16xf32>
    %15 = arith.addf %13, %14 : vector<8x16xf32>
    %cst_6 = arith.constant 5.000000e-01 : f32
    %16 = vector.broadcast %cst_6 : f32 to vector<8x16xf32>
    %17 = arith.mulf %16, %15 : vector<8x16xf32>
    %18 = arith.mulf %1, %17 : vector<8x16xf32>
    %19 = arith.mulf %1, %1 : vector<8x16xf32>
    %c1 = arith.constant 1 : index
    %20 = memref.load %arg1[%c1] : memref<4xf32, #tpu.memory_space<smem>>
    %21 = vector.broadcast %20 : f32 to vector<8x16xf32>
    %22 = arith.mulf %21, %10 : vector<8x16xf32>
    %23 = arith.subf %19, %22 : vector<8x16xf32>
    %cst_7 = arith.constant 5.000000e-01 : f32
    %24 = vector.broadcast %cst_7 : f32 to vector<8x16xf32>
    %25 = arith.mulf %24, %23 : vector<8x16xf32>
    %26 = math.tanh %25 : vector<8x16xf32>
    %cst_8 = arith.constant 1.000000e+00 : f32
    %27 = vector.broadcast %cst_8 : f32 to vector<8x16xf32>
    %28 = arith.addf %26, %27 : vector<8x16xf32>
    %cst_9 = arith.constant 5.000000e-01 : f32
    %29 = vector.broadcast %cst_9 : f32 to vector<8x16xf32>
    %30 = arith.mulf %29, %28 : vector<8x16xf32>
    %31 = arith.mulf %23, %30 : vector<8x16xf32>
    %32 = arith.mulf %1, %23 : vector<8x16xf32>
    %c2 = arith.constant 2 : index
    %33 = memref.load %arg1[%c2] : memref<4xf32, #tpu.memory_space<smem>>
    %34 = vector.broadcast %33 : f32 to vector<8x16xf32>
    %35 = arith.mulf %34, %1 : vector<8x16xf32>
    %36 = arith.subf %32, %35 : vector<8x16xf32>
    %cst_10 = arith.constant 5.000000e-01 : f32
    %37 = vector.broadcast %cst_10 : f32 to vector<8x16xf32>
    %38 = arith.mulf %37, %36 : vector<8x16xf32>
    %39 = math.tanh %38 : vector<8x16xf32>
    %cst_11 = arith.constant 1.000000e+00 : f32
    %40 = vector.broadcast %cst_11 : f32 to vector<8x16xf32>
    %41 = arith.addf %39, %40 : vector<8x16xf32>
    %cst_12 = arith.constant 5.000000e-01 : f32
    %42 = vector.broadcast %cst_12 : f32 to vector<8x16xf32>
    %43 = arith.mulf %42, %41 : vector<8x16xf32>
    %44 = arith.mulf %36, %43 : vector<8x16xf32>
    %45 = tpu.concatenate %9, %18, %31, %44 in 1 : vector<8x16xf32>, vector<8x16xf32>, vector<8x16xf32>, vector<8x16xf32> -> vector<8x64xf32>
    %c0_13 = arith.constant 0 : index
    %c0_14 = arith.constant 0 : index
    %46 = vector.load %arg3[%c0_13, %c0_14] : memref<64x128xf32, #tpu.memory_space<vmem>>, vector<64x128xf32>
    %cst_15 = arith.constant dense<0.000000e+00> : vector<8x128xf32>
    %47 = tpu.matmul %45, %46, %cst_15 {dimension_numbers = #tpu.dot_dimension_numbers<[1], [0], [0], [1], [0, 0, 1, 1], [], []>} : vector<8x64xf32>, vector<64x128xf32>, vector<8x128xf32> -> vector<8x128xf32>
    %c0_16 = arith.constant 0 : index
    %c0_17 = arith.constant 0 : index
    %48 = vector.load %arg4[%c0_16, %c0_17] : memref<1x128xf32, #tpu.memory_space<vmem>>, vector<1x128xf32>
    %49 = vector.broadcast %48 : vector<1x128xf32> to vector<8x128xf32>
    %50 = arith.addf %47, %49 : vector<8x128xf32>
    %cst_18 = arith.constant dense<0.000000e+00> : vector<8xf32>
    %51 = vector.multi_reduction <add>, %50, %cst_18 [1] : vector<8x128xf32> to vector<8xf32>
    %52 = vector.shape_cast %51 : vector<8xf32> to vector<8x1xf32>
    %cst_19 = arith.constant 3.125000e-02 : f32
    %53 = vector.broadcast %cst_19 : f32 to vector<8x1xf32>
    %54 = arith.mulf %52, %53 : vector<8x1xf32>
    %55 = tpu.iota {dimensions = array<i32: 1>} : vector<8x128xi32>
    %c32_i32 = arith.constant 32 : i32
    %56 = vector.broadcast %c32_i32 : i32 to vector<8x128xi32>
    %57 = arith.cmpi slt, %55, %56 : vector<8x128xi32>
    %58 = vector.broadcast %54 : vector<8x1xf32> to vector<8x128xf32>
    %59 = arith.subf %50, %58 : vector<8x128xf32>
    %cst_20 = arith.constant 0.000000e+00 : f32
    %60 = vector.broadcast %cst_20 : f32 to vector<8x128xf32>
    %61 = arith.select %57, %59, %60 : vector<8x128xi1>, vector<8x128xf32>
    %62 = arith.mulf %61, %61 : vector<8x128xf32>
    %cst_21 = arith.constant dense<0.000000e+00> : vector<8xf32>
    %63 = vector.multi_reduction <add>, %62, %cst_21 [1] : vector<8x128xf32> to vector<8xf32>
    %64 = vector.shape_cast %63 : vector<8xf32> to vector<8x1xf32>
    %cst_22 = arith.constant 3.125000e-02 : f32
    %65 = vector.broadcast %cst_22 : f32 to vector<8x1xf32>
    %66 = arith.mulf %64, %65 : vector<8x1xf32>
    %cst_23 = arith.constant 9.99999974E-6 : f32
    %67 = vector.broadcast %cst_23 : f32 to vector<8x1xf32>
    %68 = arith.addf %66, %67 : vector<8x1xf32>
    %69 = math.rsqrt %68 : vector<8x1xf32>
    %70 = vector.broadcast %69 : vector<8x1xf32> to vector<8x128xf32>
    %71 = arith.mulf %61, %70 : vector<8x128xf32>
    %c0_24 = arith.constant 0 : index
    %c0_25 = arith.constant 0 : index
    %72 = vector.load %arg5[%c0_24, %c0_25] : memref<1x128xf32, #tpu.memory_space<vmem>>, vector<1x128xf32>
    %73 = vector.broadcast %72 : vector<1x128xf32> to vector<8x128xf32>
    %74 = arith.mulf %71, %73 : vector<8x128xf32>
    %c0_26 = arith.constant 0 : index
    %c0_27 = arith.constant 0 : index
    %75 = vector.load %arg6[%c0_26, %c0_27] : memref<1x128xf32, #tpu.memory_space<vmem>>, vector<1x128xf32>
    %76 = vector.broadcast %75 : vector<1x128xf32> to vector<8x128xf32>
    %77 = arith.addf %74, %76 : vector<8x128xf32>
    %cst_28 = arith.constant 5.000000e-01 : f32
    %78 = vector.broadcast %cst_28 : f32 to vector<8x128xf32>
    %79 = arith.mulf %78, %77 : vector<8x128xf32>
    %80 = math.tanh %79 : vector<8x128xf32>
    %cst_29 = arith.constant 1.000000e+00 : f32
    %81 = vector.broadcast %cst_29 : f32 to vector<8x128xf32>
    %82 = arith.addf %80, %81 : vector<8x128xf32>
    %cst_30 = arith.constant 5.000000e-01 : f32
    %83 = vector.broadcast %cst_30 : f32 to vector<8x128xf32>
    %84 = arith.mulf %83, %82 : vector<8x128xf32>
    %85 = arith.mulf %77, %84 : vector<8x128xf32>
    %c0_31 = arith.constant 0 : index
    %c0_32 = arith.constant 0 : index
    %86 = vector.load %arg7[%c0_31, %c0_32] : memref<8x128xf32, #tpu.memory_space<vmem>>, vector<8x128xf32>
    tpu.vector_store %arg7[%c0_31, %c0_32], %85 {strides = array<i32>} : memref<8x128xf32, #tpu.memory_space<vmem>>, vector<8x128xf32>,
    return
  }
  func.func @transform_0(%arg0: i32, %arg1: memref<4xf32, #tpu.memory_space<smem>>) -> (i32, i32) {
    %c0_i32 = arith.constant 0 : i32
    %c0_i32_0 = arith.constant 0 : i32
    return %arg0, %c0_i32 : i32, i32
  }
  func.func @transform_1(%arg0: i32, %arg1: memref<4xf32, #tpu.memory_space<smem>>) -> (i32, i32) {
    %c0_i32 = arith.constant 0 : i32
    %c0_i32_0 = arith.constant 0 : i32
    %c0_i32_1 = arith.constant 0 : i32
    return %c0_i32, %c0_i32_0 : i32, i32
  }
  func.func @transform_2(%arg0: i32, %arg1: memref<4xf32, #tpu.memory_space<smem>>) -> (i32, i32) {
    %c0_i32 = arith.constant 0 : i32
    %c0_i32_0 = arith.constant 0 : i32
    %c0_i32_1 = arith.constant 0 : i32
    return %c0_i32, %c0_i32_0 : i32, i32
  }
  func.func @transform_3(%arg0: i32, %arg1: memref<4xf32, #tpu.memory_space<smem>>) -> (i32, i32) {
    %c0_i32 = arith.constant 0 : i32
    %c0_i32_0 = arith.constant 0 : i32
    %c0_i32_1 = arith.constant 0 : i32
    return %c0_i32, %c0_i32_0 : i32, i32
  }
  func.func @transform_4(%arg0: i32, %arg1: memref<4xf32, #tpu.memory_space<smem>>) -> (i32, i32) {
    %c0_i32 = arith.constant 0 : i32
    %c0_i32_0 = arith.constant 0 : i32
    %c0_i32_1 = arith.constant 0 : i32
    return %c0_i32, %c0_i32_0 : i32, i32
  }
  func.func @transform_5(%arg0: i32, %arg1: memref<4xf32, #tpu.memory_space<smem>>) -> (i32, i32) {
    %c0_i32 = arith.constant 0 : i32
    %c0_i32_0 = arith.constant 0 : i32
    return %arg0, %c0_i32 : i32, i32
  }
}

</mosaic_0001>

<llo_original>
// kernel: gram_layer_forward.1
$region0: #{gram_layer_forward.1}
  #allocation0 [shape = 'u32[]', space=smem, size = 0x4, offset = 0x4, fixed_abs, tag = 'smem constant byte address 0x4 - core index']
  #allocation1 [shape = 'u32[144,128]{1,0:T(1,128)}', space=vmem, size = 0x12000, scoped, tag = 'internal scratch']
  #allocation2 [shape = 's32[1]{0}', space=sflag, size = 0x4, scoped, tag = 'scoped memory for gram_layer_forward.1']
  #allocation3 [shape = 'u8[512]{0}', space=smem, size = 0x200, scoped, tag = 'prefetched SMEM operand 0']
  %s0 = inlined_call_operand.vmem [shape: f32[4], index: 0, kind: input, shape index: {}]
  %s1 = inlined_call_operand.vmem [shape: f32[24,16], index: 1, kind: input, shape index: {}]
  %s2 = inlined_call_operand.vmem [shape: f32[64,128], index: 2, kind: input, shape index: {}]
  %s3 = inlined_call_operand.vmem [shape: f32[1,128], index: 3, kind: input, shape index: {}]
  %s4 = inlined_call_operand.vmem [shape: f32[1,128], index: 4, kind: input, shape index: {}]
  %s5 = inlined_call_operand.vmem [shape: f32[1,128], index: 5, kind: input, shape index: {}]
  %s6 = inlined_call_operand.hbm [shape: f32[24,128], index: 6, kind: output, shape index: {}]
  %s7 = sld [smem:[#allocation0]]
  $region53: #{gram_layer_forward.1} parent=0
    _
  %s9 = ssub.s32 1, %s7
  %s10 = scalar_select 0, %s9, %s7
  %s11 = sshll.u32 %s0, 4
  %s12 = int_to_ptr.vmem [resolvable:$true] %s11
  %14 = dma.vmem_to_smem %s12, 16, [#allocation3], [#allocation2]
  %15 = dma.done [#allocation2], 16
  %16 = sfence
  $region1: #{gram_layer_forward.1} parent=0
    #allocation4 [shape = 'u8[8192]{0}', space=vmem, size = 0x2000, scoped, tag = 'output window, operand 0']
    #allocation5 [shape = 's32[2]{0}', space=sflag, size = 0x8, scoped, tag = 'scoped memory for gram_layer_forward.1']
    %17 = vsyncpa [#allocation5], 0
    %s18 = scalar_lea.sflag [#allocation5], 1
    %19 = vsyncpa %s18, 0
    loop: start=0, step=1, limit=5
    $region2: #{gram_layer_forward.1} parent=1 // loop_pre_header
      _
    $region3: #{gram_layer_forward.1} parent=1 // loop_header
      %s21 = sphi 0, %s25
      %p22 = scmp.ge.s32.totalorder %s21, 5
      %s31 = sphi 0, %s33
      %s34 = sphi 0, %s31
      %s35 = sphi 0, %s34
      %s51 = sphi 0, %s35
      %s55 = sphi 0, %s55
      %s57 = sphi 0, %s55
      %s58 = sphi 0, %s57
      %s72 = sphi 0, %s58
      %s76 = sphi 0, %s76
      %s78 = sphi 0, %s76
      %s79 = sphi 0, %s78
      %s93 = sphi 0, %s79
      %s97 = sphi 0, %s97
      %s99 = sphi 0, %s97
      %s100 = sphi 0, %s99
      %s114 = sphi 0, %s100
      %s118 = sphi 0, %s118
      %s120 = sphi 0, %s118
      %s121 = sphi 0, %s120
      %s135 = sphi 0, %s121
      %s141 = sphi 0, %s143
      %s144 = sphi 0, %s141
      %s145 = sphi 0, %s144
      %s161 = sphi 0, %s145
    $region4: #{gram_layer_forward.1} parent=1 // loop_header_branch
      %24 = sbr.rel (%p22) target = $region8
    $region5: #{gram_layer_forward.1} parent=1 // loop_body
      %s26 = ssub.s32 %s21, 1
      %s27 = ssub.s32 %s21, 2
      %s28 = sadd.s32 %s21, 1
      %s29 = ssub.s32 %s21, %s28
      %p30 = scmp.eq.s32.totalorder %s29, 0
      %s32 = sadd.s32 %s31, 1
      %s33 = scalar_select %p30, %s31, %s32
      %p36 = pneg %p30
      %p37 = scmp.eq.s32.totalorder %s21, 2
      %p38 = por %p36, %p37
      %p39 = scmp.ne.s32.totalorder %s31, %s34
      %p40 = scmp.eq.s32.totalorder %s21, 0
      %p41 = por %p39, %p40
      %p42 = scmp.ne.s32.totalorder %s31, %s34
      %p43 = scmp.eq.s32.totalorder %s26, 2
      %p44 = por %p42, %p43
      %p45 = scmp.ne.s32.totalorder %s34, %s35
      %p46 = scmp.eq.s32.totalorder %s26, 0
      %p47 = por %p45, %p46
      %p48 = scmp.ne.s32.totalorder %s34, %s35
      %p49 = scmp.eq.s32.totalorder %s27, 2
      %p50 = por %p48, %p49
      %p52 = scmp.ne.s32.totalorder %s35, %s51
      %p53 = scmp.eq.s32.totalorder %s27, 0
      %p54 = por %p52, %p53
      %s56 = sadd.s32 %s55, 1
      %p59 = scmp.eq.s32.totalorder %s21, 2
      %p60 = scmp.ne.s32.totalorder %s55, %s57
      %p61 = scmp.eq.s32.totalorder %s21, 0
      %p62 = por %p60, %p61
      %p63 = scmp.ne.s32.totalorder %s55, %s57
      %p64 = scmp.eq.s32.totalorder %s26, 2
      %p65 = por %p63, %p64
      %p66 = scmp.ne.s32.totalorder %s57, %s58
      %p67 = scmp.eq.s32.totalorder %s26, 0
      %p68 = por %p66, %p67
      %p69 = scmp.ne.s32.totalorder %s57, %s58
      %p70 = scmp.eq.s32.totalorder %s27, 2
      %p71 = por %p69, %p70
      %p73 = scmp.ne.s32.totalorder %s58, %s72
      %p74 = scmp.eq.s32.totalorder %s27, 0
      %p75 = por %p73, %p74
      %s77 = sadd.s32 %s76, 1
      %p80 = scmp.eq.s32.totalorder %s21, 2
      %p81 = scmp.ne.s32.totalorder %s76, %s78
      %p82 = scmp.eq.s32.totalorder %s21, 0
      %p83 = por %p81, %p82
      %p84 = scmp.ne.s32.totalorder %s76, %s78
      %p85 = scmp.eq.s32.totalorder %s26, 2
      %p86 = por %p84, %p85
      %p87 = scmp.ne.s32.totalorder %s78, %s79
      %p88 = scmp.eq.s32.totalorder %s26, 0
      %p89 = por %p87, %p88
      %p90 = scmp.ne.s32.totalorder %s78, %s79
      %p91 = scmp.eq.s32.totalorder %s27, 2
      %p92 = por %p90, %p91
      %p94 = scmp.ne.s32.totalorder %s79, %s93
      %p95 = scmp.eq.s32.totalorder %s27, 0
      %p96 = por %p94, %p95
      %s98 = sadd.s32 %s97, 1
      %p101 = scmp.eq.s32.totalorder %s21, 2
      %p102 = scmp.ne.s32.totalorder %s97, %s99
      %p103 = scmp.eq.s32.totalorder %s21, 0
      %p104 = por %p102, %p103
      %p105 = scmp.ne.s32.totalorder %s97, %s99
      %p106 = scmp.eq.s32.totalorder %s26, 2
      %p107 = por %p105, %p106
      %p108 = scmp.ne.s32.totalorder %s99, %s100
      %p109 = scmp.eq.s32.totalorder %s26, 0
      %p110 = por %p108, %p109
      %p111 = scmp.ne.s32.totalorder %s99, %s100
      %p112 = scmp.eq.s32.totalorder %s27, 2
      %p113 = por %p111, %p112
      %p115 = scmp.ne.s32.totalorder %s100, %s114
      %p116 = scmp.eq.s32.totalorder %s27, 0
      %p117 = por %p115, %p116
      %s119 = sadd.s32 %s118, 1
      %p122 = scmp.eq.s32.totalorder %s21, 2
      %p123 = scmp.ne.s32.totalorder %s118, %s120
      %p124 = scmp.eq.s32.totalorder %s21, 0
      %p125 = por %p123, %p124
      %p126 = scmp.ne.s32.totalorder %s118, %s120
      %p127 = scmp.eq.s32.totalorder %s26, 2
      %p128 = por %p126, %p127
      %p129 = scmp.ne.s32.totalorder %s120, %s121
      %p130 = scmp.eq.s32.totalorder %s26, 0
      %p131 = por %p129, %p130
      %p132 = scmp.ne.s32.totalorder %s120, %s121
      %p133 = scmp.eq.s32.totalorder %s27, 2
      %p134 = por %p132, %p133
      %p136 = scmp.ne.s32.totalorder %s121, %s135
      %p137 = scmp.eq.s32.totalorder %s27, 0
      %p138 = por %p136, %p137
      %s139 = ssub.s32 %s21, %s28
      %p140 = scmp.eq.s32.totalorder %s139, 0
      %s142 = sadd.s32 %s141, 1
      %s143 = scalar_select %p140, %s141, %s142
      %p146 = pneg %p140
      %p147 = scmp.eq.s32.totalorder %s21, 2
      %p148 = por %p146, %p147
      %p149 = scmp.ne.s32.totalorder %s141, %s144
      %p150 = scmp.eq.s32.totalorder %s21, 0
      %p151 = por %p149, %p150
      %p152 = scmp.ne.s32.totalorder %s141, %s144
      %p153 = scmp.eq.s32.totalorder %s26, 2
      %p154 = por %p152, %p153
      %p155 = scmp.ne.s32.totalorder %s144, %s145
      %p156 = scmp.eq.s32.totalorder %s26, 0
      %p157 = por %p155, %p156
      %p158 = scmp.ne.s32.totalorder %s144, %s145
      %p159 = scmp.eq.s32.totalorder %s27, 2
      %p160 = por %p158, %p159
      %p162 = scmp.ne.s32.totalorder %s145, %s161
      %p163 = scmp.eq.s32.totalorder %s27, 0
      %p164 = por %p162, %p163
      %p165 = scmp.le.s32.totalorder 1, %s21
      %p166 = scmp.lt.s32.totalorder %s21, 4
      %p167 = pnand %p165, %p166
      %p168 = pneg %p167
      // Predicated region
      $region9: #{gram_layer_forward.1} parent=5 // pred_check
        _
      $region10: #{gram_layer_forward.1} parent=5 // pred_check_branch
        %170 = sbr.rel (%p167) target = $region12
      $region11: #{gram_layer_forward.1} parent=5 // pred_region
        %s171 = ssub.s32 %s21, 1
        // Predicated region
        $region13: #{gram_layer_forward.1} parent=11 // pred_check
          %p172 = pneg %p68
        $region14: #{gram_layer_forward.1} parent=11 // pred_check_branch
          %174 = sbr.rel (%p172) target = $region16
        $region15: #{gram_layer_forward.1} parent=11 // pred_region
          _
        $region16: #{gram_layer_forward.1} parent=11 // pred_fallthru
          _
        // Predicated region
        $region17: #{gram_layer_forward.1} parent=11 // pred_check
          %p175 = pneg %p89
        $region18: #{gram_layer_forward.1} parent=11 // pred_check_branch
          %177 = sbr.rel (%p175) target = $region20
        $region19: #{gram_layer_forward.1} parent=11 // pred_region
          _
        $region20: #{gram_layer_forward.1} parent=11 // pred_fallthru
          _
        // Predicated region
        $region21: #{gram_layer_forward.1} parent=11 // pred_check
          %p178 = pneg %p110
        $region22: #{gram_layer_forward.1} parent=11 // pred_check_branch
          %180 = sbr.rel (%p178) target = $region24
        $region23: #{gram_layer_forward.1} parent=11 // pred_region
          _
        $region24: #{gram_layer_forward.1} parent=11 // pred_fallthru
          _
        // Predicated region
        $region25: #{gram_layer_forward.1} parent=11 // pred_check
          %p181 = pneg %p131
        $region26: #{gram_layer_forward.1} parent=11 // pred_check_branch
          %183 = sbr.rel (%p181) target = $region28
        $region27: #{gram_layer_forward.1} parent=11 // pred_region
          _
        $region28: #{gram_layer_forward.1} parent=11 // pred_fallthru
          _
      $region12: #{gram_layer_forward.1} parent=5 // pred_fallthru
        _
      %p184 = scmp.lt.s32.totalorder %s21, 3
      // Predicated region
      $region29: #{gram_layer_forward.1} parent=5 // pred_check
        %p185 = pneg %p184
      $region30: #{gram_layer_forward.1} parent=5 // pred_check_branch
        %187 = sbr.rel (%p185) target = $region32
      $region31: #{gram_layer_forward.1} parent=5 // pred_region
        // Predicated region
        $region33: #{gram_layer_forward.1} parent=31 // pred_check
          %p188 = pneg %p41
        $region34: #{gram_layer_forward.1} parent=31 // pred_check_branch
          %190 = sbr.rel (%p188) target = $region36
        $region35: #{gram_layer_forward.1} parent=31 // pred_region
          %p191 = scmp.lt.s32.totalorder %s21, 2
          %s192 = scalar_select %p191, %s21, 2
          %s193 = smul.addr %s192, 8
          %s194 = scalar_lea.vmem %s1, %s193
        $region36: #{gram_layer_forward.1} parent=31 // pred_fallthru
          _
      $region32: #{gram_layer_forward.1} parent=5 // pred_fallthru
        _
      %p195 = scmp.le.s32.totalorder 1, %s21
      %p196 = scmp.lt.s32.totalorder %s21, 4
      %p197 = pnand %p195, %p196
      %p198 = pneg %p197
      // Predicated region
      $region37: #{gram_layer_forward.1} parent=5 // pred_check
        _
      $region38: #{gram_layer_forward.1} parent=5 // pred_check_branch
        %200 = sbr.rel (%p197) target = $region40
      $region39: #{gram_layer_forward.1} parent=5 // pred_region
        %s201 = ssub.s32 %s21, 1
        %p202 = scmp.lt.s32.totalorder %s26, 2
        %s203 = scalar_select %p202, %s26, 2
        %s204 = smul.addr %s203, 8
        %s205 = scalar_lea.vmem %s1, %s204
        %p206 = pneg %p47
        %p207 = pneg %p44
        %p208 = pneg %p68
        %p209 = pneg %p65
        %p210 = pneg %p89
        %p211 = pneg %p86
        %p212 = pneg %p110
        %p213 = pneg %p107
        %p214 = pneg %p131
        %p215 = pneg %p128
        %p216 = pneg %p157
        %p217 = pneg %p154
        %s218 = sand.u32 %s144, 1
        %s219 = scalar_lea.sflag [#allocation5], %s218
        %s220 = sand.u32 %s144, 1
        %s221 = smul.addr %s220, 8
        %s222 = scalar_lea.vmem [#allocation4], %s221
        %p223 = scmp.lt.s32.totalorder %s26, 2
        %s224 = scalar_select %p223, %s26, 2
        %s225 = smul.addr %s224, 8
        %s226 = scalar_lea.vmem %s1, %s225
        %v227 = vld [vmem:[%s226] sm:$0xff]
        %v228 = vtanh.pop %v227
        %v229 = vmul.f32 %v227, 0.5
        %v230 = vtanh.pop %v229
        %v231 = vadd.f32 %v230, 1.0
        %v232 = vmul.f32 %v231, 0.5
        %v233 = vmul.f32 %v227, %v232
        %v234 = vmul.f32 %v228, 0.5
        %v235 = vtanh.pop %v234
        %v236 = vadd.f32 %v235, 1.0
        %v237 = vmul.f32 %v236, 0.5
        %v238 = vmul.f32 %v228, %v237
        %v239 = vmul.f32 %v228, %v228
        %s240 = sld [smem:[#allocation3 + $0x1]]
        %v241 = vstv %s240
        %v242 = vsub.f32 %v239, %v241
        %v243 = vmul.f32 %v242, 0.5
        %v244 = vtanh.pop %v243
        %v245 = vadd.f32 %v244, 1.0
        %v246 = vmul.f32 %v245, 0.5
        %v247 = vmul.f32 %v242, %v246
        %v248 = vmul.f32 %v228, %v242
        %s249 = sld [smem:[#allocation3 + $0x2]]
        %v250 = vstv %s249
        %v251 = vmul.f32 %v250, %v228
        %v252 = vsub.f32 %v248, %v251
        %v253 = vmul.f32 %v252, 0.5
        %v254 = vtanh.pop %v253
        %v255 = vadd.f32 %v254, 1.0
        %v256 = vmul.f32 %v255, 0.5
        %v257 = vmul.f32 %v252, %v256
        %259 = vrot.lane.b32.xlu0 %v238, 16
        %v260 = vpop.permute.xlu0 %259
        %263 = vrot.lane.b32.xlu0 %v247, 32
        %v264 = vpop.permute.xlu0 %263
        %267 = vrot.lane.b32.xlu0 %v257, 48
        %v268 = vpop.permute.xlu0 %267
        %vm270 = vcmask 130048
        %v271 = vsel %vm270, %v233, %v260
        %vm272 = vcmask 261120
        %v273 = vsel %vm272, %v271, %v264
        %vm274 = vcmask 392192
        %v275 = vsel %vm274, %v273, %v268
        %v276 = vld [vmem:[%s2] sm:$0xff]
        %v277 = vld [vmem:[%s2 + $0x8] sm:$0xff]
        %v278 = vld [vmem:[%s2 + $0x10] sm:$0xff]
        %v279 = vld [vmem:[%s2 + $0x18] sm:$0xff]
        %v280 = vld [vmem:[%s2 + $0x20] sm:$0xff]
        %v281 = vld [vmem:[%s2 + $0x28] sm:$0xff]
        %v282 = vld [vmem:[%s2 + $0x30] sm:$0xff]
        %v283 = vld [vmem:[%s2 + $0x38] sm:$0xff]
        %v284 = vld [vmem:[%s3] sm:$0x1]
        %v286 = vlaneseq
        %v287 = vshrl.u32 %v286, 7
        %v288 = vsub.s32 0, %v287
        %v289 = vrot.slane %v284, %v288
        %vm291 = vcmask 523264
        %v293 = vsel %vm291, %v275, 0
        %295 = vmatprep.subr.mxu0 0.0
        %296 = vmatpush1.msra.mxu0 0.0
        %297 = vmatprep.subr.mxu0 0.0
        %298 = vmatpush1.msra.mxu0 0.0
        %299 = vmatprep.subr.mxu0 0.0
        %300 = vmatpush1.msra.mxu0 0.0
        %301 = vmatprep.subr.mxu0 0.0
        %302 = vmatpush1.msra.mxu0 0.0
        %303 = vmatprep.subr.mxu0 0.0
        %304 = vmatpush1.msra.mxu0 0.0
        %305 = vmatprep.subr.mxu0 0.0
        %306 = vmatpush1.msra.mxu0 0.0
        %307 = vmatprep.subr.mxu0 0.0
        %308 = vmatpush1.msra.mxu0 0.0
        %309 = vmatprep.subr.mxu0 0.0
        %310 = vmatpush1.msra.mxu0 0.0
        %311 = vmatprep.subr.mxu0 0.0
        %312 = vmatpush1.msra.mxu0 %v283
        %313 = vmatprep.subr.mxu0 0.0
        %314 = vmatpush1.msra.mxu0 %v282
        %315 = vmatprep.subr.mxu0 0.0
        %316 = vmatpush1.msra.mxu0 %v281
        %317 = vmatprep.subr.mxu0 0.0
        %318 = vmatpush1.msra.mxu0 %v280
        %319 = vmatprep.subr.mxu0 0.0
        %320 = vmatpush1.msra.mxu0 %v279
        %321 = vmatprep.subr.mxu0 0.0
        %322 = vmatpush1.msra.mxu0 %v278
        %323 = vmatprep.subr.mxu0 0.0
        %324 = vmatpush1.msra.mxu0 %v277
        %325 = vmatprep.subr.mxu0 0.0
        %326 = vmatpush1.msra.mxu0 %v276
        %327 = vmatprep.subr.mxu0 0.0
        %328 = vmatpush2.msra.mxu0 0.0
        %329 = vmatprep.subr.mxu0 0.0
        %330 = vmatpush2.msra.mxu0 0.0
        %331 = vmatprep.subr.mxu0 0.0
        %332 = vmatpush2.msra.mxu0 0.0
        %333 = vmatprep.subr.mxu0 0.0
        %334 = vmatpush2.msra.mxu0 0.0
        %335 = vmatprep.subr.mxu0 0.0
        %336 = vmatpush2.msra.mxu0 0.0
        %337 = vmatprep.subr.mxu0 0.0
        %338 = vmatpush2.msra.mxu0 0.0
        %339 = vmatprep.subr.mxu0 0.0
        %340 = vmatpush2.msra.mxu0 0.0
        %341 = vmatprep.subr.mxu0 0.0
        %342 = vmatpush2.msra.mxu0 0.0
        %343 = vmatprep.subr.mxu0 0.0
        %344 = vmatpush2.msra.mxu0 0.0
        %345 = vmatprep.subr.mxu0 0.0
        %346 = vmatpush2.msra.mxu0 0.0
        %347 = vmatprep.subr.mxu0 0.0
        %348 = vmatpush2.msra.mxu0 0.0
        %349 = vmatprep.subr.mxu0 0.0
        %350 = vmatpush2.msra.mxu0 0.0
        %351 = vmatprep.subr.mxu0 0.0
        %352 = vmatpush2.msra.mxu0 0.0
        %353 = vmatprep.subr.mxu0 0.0
        %354 = vmatpush2.msra.mxu0 0.0
        %355 = vmatprep.subr.mxu0 0.0
        %356 = vmatpush2.msra.mxu0 0.0
        %357 = vmatprep.subr.mxu0 0.0
        %358 = vmatpush2.msra.mxu0 0.0
        %359 = vmatprep.mubr.f32.mxu0 0.0
        %360 = vmatmul.mubr.f32.gmra.mxu0 %v293
        %v361 = vpop.f32.mrf.mxu0
        %v362 = vadd.f32 %v289, %v361
        %v363 = vpop.f32.mrf.mxu0
        %364 = vdwg.mxu0
        %365 = vadd.xlane.f32.xlu0 %v362
        %v366 = vpop.xlane.xlu0 %365
        %v367 = vmul.f32 %v366, 0.03125
        %v368 = vlaneseq
        %v369 = vand.u32 %v368, 127
        %vm370 = vcmp.lt.s32.totalorder %v369, 32
        %v371 = vsub.f32 %v362, %v367
        %v372 = vsel %vm370, %v371, 0.0
        %v373 = vmul.f32 %v372, %v372
        %374 = vadd.xlane.f32.xlu0 %v373
        %v375 = vpop.xlane.xlu0 %374
        %v376 = vmul.f32 %v375, 0.03125
        %v377 = vadd.f32 %v376, 1e-05
        %v378 = vrsqrt.pop %v377
        %v379 = vmul.f32 %v372, %v378
        %v380 = vld [vmem:[%s4] sm:$0x1]
        %v382 = vlaneseq
        %v383 = vshrl.u32 %v382, 7
        %v384 = vsub.s32 0, %v383
        %v385 = vrot.slane %v380, %v384
        %v387 = vmul.f32 %v379, %v385
        %v388 = vld [vmem:[%s5] sm:$0x1]
        %v390 = vlaneseq
        %v391 = vshrl.u32 %v390, 7
        %v392 = vsub.s32 0, %v391
        %v393 = vrot.slane %v388, %v392
        %v395 = vadd.f32 %v387, %v393
        %v396 = vmul.f32 %v395, 0.5
        %v397 = vtanh.pop %v396
        %v398 = vadd.f32 %v397, 1.0
        %v399 = vmul.f32 %v398, 0.5
        %v400 = vmul.f32 %v395, %v399
        %401 = vst [vmem:[%s222] sm:$0xff] %v400
        %s402 = sand.u32 %s144, 1
        %s403 = scalar_lea.sflag [#allocation5], %s402
        %s404 = sand.u32 %s144, 1
        %s405 = smul.addr %s404, 8
        %s406 = scalar_lea.vmem [#allocation4], %s405
        // Predicated region
        $region41: #{gram_layer_forward.1} parent=39 // pred_check
          %p407 = pneg %p154
        $region42: #{gram_layer_forward.1} parent=39 // pred_check_branch
          %409 = sbr.rel (%p407) target = $region44
        $region43: #{gram_layer_forward.1} parent=39 // pred_region
          %s411 = ssub.s32 128, 128
          %412 = vsyncadd %s403, %s411
          %s413 = smul.addr %s26, 128
          %s414 = scalar_lea.hbm %s6, %s413
          %s416 = sshll.u32 %s406, 4
          %s417 = int_to_ptr.vmem [resolvable:$true] %s416
          %419 = dma.vmem_to_hbm [thread:$0]  %s417, 128, %s414, %s403
        $region44: #{gram_layer_forward.1} parent=39 // pred_fallthru
          _
      $region40: #{gram_layer_forward.1} parent=5 // pred_fallthru
        _
      %p420 = scmp.le.s32.totalorder 2, %s21
      // Predicated region
      $region45: #{gram_layer_forward.1} parent=5 // pred_check
        %p421 = pneg %p420
      $region46: #{gram_layer_forward.1} parent=5 // pred_check_branch
        %423 = sbr.rel (%p421) target = $region48
      $region47: #{gram_layer_forward.1} parent=5 // pred_region
        %s424 = ssub.s32 %s21, 2
        // Predicated region
        $region49: #{gram_layer_forward.1} parent=47 // pred_check
          %p425 = pneg %p160
        $region50: #{gram_layer_forward.1} parent=47 // pred_check_branch
          %427 = sbr.rel (%p425) target = $region52
        $region51: #{gram_layer_forward.1} parent=47 // pred_region
          %s428 = sand.u32 %s145, 1
          %s429 = scalar_lea.sflag [#allocation5], %s428
          %s430 = sand.u32 %s145, 1
          %s431 = smul.addr %s430, 8
          %s432 = scalar_lea.vmem [#allocation4], %s431
          %433 = dma.done %s429, 128
        $region52: #{gram_layer_forward.1} parent=47 // pred_fallthru
          _
      $region48: #{gram_layer_forward.1} parent=5 // pred_fallthru
        _
    $region6: #{gram_layer_forward.1} parent=1 // loop_footer
      %s25 = sadd.s32 1, %s21
    $region7: #{gram_layer_forward.1} parent=1 // loop_footer_branch
      %20 = sbr.rel target = $region3
    $region8: #{gram_layer_forward.1} parent=1 // loop_exit
      _
    %434 = vsyncpa [#allocation5], 1
    %s435 = scalar_lea.sflag [#allocation5], 1
    %436 = vsyncpa %s435, 1

</llo_original>
